<compile_context>
chip_gen: v7x
topology: tpu7x:2x2x1
jax: 0.10.0
libtpu: 0.0.40
codegen_flags: <defaults>
</compile_context>

<pallas_src>
import jax
import jax.numpy as jnp
import numpy as np
from jax.experimental import pallas as pl
from jax.experimental.pallas import tpu as pltpu


# ----------------------------------------------------------------------------
# Pallas kernels
# ----------------------------------------------------------------------------
def input_proj_kernel(x_ref, w_ref, b_ref, o_ref):
    """Hoisted input projection for BOTH directions of one LSTM layer.

    x_ref : (S, M, F)   direction-stacked input slabs (S=1 for the embeddings,
                        S=2 for the previous layer's fwd/bwd halves), M = T*B
    w_ref : (S, F, 8H)  per-source weights, N packed as [fwd 4H | bwd 4H]
    b_ref : (1, 8H)     (b_ih + b_hh) packed as [fwd 4H | bwd 4H]
    o_ref : (2, M, 4H)  gate pre-activations per direction
    """
    S = x_ref.shape[0]
    h4 = o_ref.shape[2]
    acc = jnp.dot(x_ref[0], w_ref[0], preferred_element_type=jnp.float32)
    for s in range(1, S):
        acc = acc + jnp.dot(x_ref[s], w_ref[s], preferred_element_type=jnp.float32)
    o_ref[0] = acc[:, :h4] + b_ref[:, :h4]
    o_ref[1] = acc[:, h4:] + b_ref[:, h4:]


def bilstm_recurrence_kernel(gx_ref, whh_ref, o_ref):
    """LSTM recurrence for one direction. Grid axis 0 = direction (parallel).

    gx_ref : (1, T, B, 4H)  precomputed x@W_ih + (b_ih+b_hh) for this direction
    whh_ref: (1, H, 4H)     transposed recurrent weights for this direction
    o_ref  : (1, T, B, H)   hidden states, already written at the correct t
    """
    d = pl.program_id(0)
    T, B = gx_ref.shape[1], gx_ref.shape[2]
    H = o_ref.shape[3]
    whh = whh_ref[0]                       # (H, 4H), loaded once before the loop
    reverse = d == 1

    def step(i, carry):
        h, c = carry
        t = jnp.where(reverse, T - 1 - i, i)
        gates = gx_ref[0, t] + jnp.dot(h, whh, preferred_element_type=jnp.float32)
        i_g = jax.nn.sigmoid(gates[:, 0 * H:1 * H])
        f_g = jax.nn.sigmoid(gates[:, 1 * H:2 * H])
        g_g = jnp.tanh(gates[:, 2 * H:3 * H])
        o_g = jax.nn.sigmoid(gates[:, 3 * H:4 * H])
        c_new = f_g * c + i_g * g_g
        h_new = o_g * jnp.tanh(c_new)
        o_ref[0, t] = h_new
        return h_new, c_new

    init = (jnp.zeros((B, H), jnp.float32), jnp.zeros((B, H), jnp.float32))
    jax.lax.fori_loop(0, T, step, init, unroll=True)


def hidden2tag_kernel(h_ref, w_ref, b_ref, o_ref):
    """hidden2tag on direction-stacked hidden states (no concat needed).

    h_ref : (2, M, H); w_ref : (2, H, Npad); b_ref : (1, Npad); o_ref : (M, Npad)
    """
    acc = jnp.dot(h_ref[0], w_ref[0], preferred_element_type=jnp.float32)
    acc = acc + jnp.dot(h_ref[1], w_ref[1], preferred_element_type=jnp.float32)
    o_ref[...] = acc + b_ref[...]


# ----------------------------------------------------------------------------
# Pallas wrappers
# ----------------------------------------------------------------------------
def input_proj_pallas(x, w, b):
    """x: (S, M, F); w: (S, F, 8H); b: (1, 8H) -> (2, M, 4H)."""
    S, M, F = x.shape
    N8 = w.shape[2]
    H4 = N8 // 2
    return pl.pallas_call(
        input_proj_kernel,
        out_shape=jax.ShapeDtypeStruct((2, M, H4), jnp.float32),
        grid_spec=pltpu.PrefetchScalarGridSpec(
            num_scalar_prefetch=0,
            grid=(1,),
            in_specs=[
                pl.BlockSpec((S, M, F), lambda i: (0, 0, 0)),
                pl.BlockSpec((S, F, N8), lambda i: (0, 0, 0)),
                pl.BlockSpec((1, N8), lambda i: (0, 0)),
            ],
            out_specs=pl.BlockSpec((2, M, H4), lambda i: (0, 0, 0)),
        ),
    )(x, w, b)


def bilstm_recurrence_pallas(gx, w_hh):
    """gx: (2, T, B, 4H); w_hh: (2, H, 4H) -> (2, T, B, H)."""
    _, T, B, H4 = gx.shape
    H = H4 // 4
    return pl.pallas_call(
        bilstm_recurrence_kernel,
        out_shape=jax.ShapeDtypeStruct((2, T, B, H), jnp.float32),
        grid_spec=pltpu.PrefetchScalarGridSpec(
            num_scalar_prefetch=0,
            grid=(2,),
            in_specs=[
                pl.BlockSpec((1, T, B, H4), lambda d: (d, 0, 0, 0)),
                pl.BlockSpec((1, H, H4), lambda d: (d, 0, 0)),
            ],
            out_specs=pl.BlockSpec((1, T, B, H), lambda d: (d, 0, 0, 0)),
        ),
        compiler_params=pltpu.CompilerParams(
            dimension_semantics=("parallel",)),  # independent directions -> 2 TCs on v7x
    )(gx, w_hh)


def hidden2tag_pallas(h, w, b):
    """h: (2, M, H); w: (2, H, Npad); b: (1, Npad) -> (M, Npad)."""
    _, M, H = h.shape
    N = w.shape[2]
    return pl.pallas_call(
        hidden2tag_kernel,
        out_shape=jax.ShapeDtypeStruct((M, N), jnp.float32),
        grid_spec=pltpu.PrefetchScalarGridSpec(
            num_scalar_prefetch=0,
            grid=(1,),
            in_specs=[
                pl.BlockSpec((2, M, H), lambda i: (0, 0, 0)),
                pl.BlockSpec((2, H, N), lambda i: (0, 0, 0)),
                pl.BlockSpec((1, N), lambda i: (0, 0)),
            ],
            out_specs=pl.BlockSpec((M, N), lambda i: (0, 0)),
        ),
    )(h, w, b)


# ----------------------------------------------------------------------------
# One-time parameter preparation (transposes / packing / padding done ONCE)
# ----------------------------------------------------------------------------
def prepare_pallas_params(params, *, embedding_dim, hidden_dim, num_layers, labelset_size):
    H = hidden_dim // 2
    prep = {"embedding": jnp.asarray(params["embedding"], jnp.float32), "lstm": []}
    for layer in range(num_layers):
        p = params["lstm"][layer]
        in_dim = embedding_dim if layer == 0 else hidden_dim
        S = 1 if layer == 0 else 2
        F = in_dim // S
        # (S, F, 8H): per source-slab weights, N packed as [fwd 4H | bwd 4H]
        w_proj = jnp.stack(
            [jnp.concatenate([p["w_ih"][:, s * F:(s + 1) * F].T,
                              p["w_ih_r"][:, s * F:(s + 1) * F].T], axis=1)
             for s in range(S)], axis=0).astype(jnp.float32)
        b_proj = jnp.concatenate([p["b_ih"] + p["b_hh"],
                                  p["b_ih_r"] + p["b_hh_r"]])[None, :].astype(jnp.float32)
        w_hh = jnp.stack([p["w_hh"].T, p["w_hh_r"].T], axis=0).astype(jnp.float32)
        prep["lstm"].append({"w_proj": w_proj, "b_proj": b_proj, "w_hh": w_hh})

    LL = labelset_size * labelset_size
    n_pad = ((LL + 127) // 128) * 128           # lane-dense output width
    pad = n_pad - LL
    W = params["h2t_w"]                         # (LL, hidden_dim)
    w0 = jnp.pad(W[:, :H].T, ((0, 0), (0, pad)))
    w1 = jnp.pad(W[:, H:].T, ((0, 0), (0, pad)))
    prep["h2t_w"] = jnp.stack([w0, w1], axis=0).astype(jnp.float32)   # (2, H, Npad)
    prep["h2t_b"] = jnp.pad(params["h2t_b"], (0, pad))[None, :].astype(jnp.float32)
    prep["n_pad"] = n_pad
    return prep


# ----------------------------------------------------------------------------
# Forward (Pallas)
# ----------------------------------------------------------------------------
def bilstm_crf_forward(sentences, prep, *, hidden_dim, num_layers, labelset_size):
    """Pallas implementation of BiLSTM_CRF_L.forward (inference).

    sentences: (T, B) int32 -> crf_scores: (T, B, L, L) float32
    """
    T, B = sentences.shape
    H = hidden_dim // 2

    # Embedding lookup (plain JAX gather); dropout1/dropout2 are identity (eval mode).
    x = prep["embedding"][sentences].reshape(1, T * B, -1)          # (1, T*B, E)

    for layer in range(num_layers):
        lp = prep["lstm"][layer]
        gx = input_proj_pallas(x, lp["w_proj"], lp["b_proj"])       # (2, T*B, 4H)
        gx = gx.reshape(2, T, B, 4 * H)                             # free reshape
        h = bilstm_recurrence_pallas(gx, lp["w_hh"])                # (2, T, B, H)
        x = h.reshape(2, T * B, H)                                  # free reshape

    crf = hidden2tag_pallas(x, prep["h2t_w"], prep["h2t_b"])        # (T*B, Npad)
    ll = labelset_size * labelset_size
    return crf[:, :ll].reshape(T, B, labelset_size, labelset_size)


# ----------------------------------------------------------------------------
# Pure-JAX reference (for correctness check)
# ----------------------------------------------------------------------------
def lstm_direction_ref(x, w_ih, w_hh, b_ih, b_hh):
    H = w_hh.shape[1]
    B = x.shape[1]

    def step(carry, x_t):
        h, c = carry
        gates = x_t @ w_ih.T + h @ w_hh.T + b_ih + b_hh
        i, f, g, o = jnp.split(gates, 4, axis=-1)
        i, f, o = jax.nn.sigmoid(i), jax.nn.sigmoid(f), jax.nn.sigmoid(o)
        g = jnp.tanh(g)
        c = f * c + i * g
        h = o * jnp.tanh(c)
        return (h, c), h

    init = (jnp.zeros((B, H), jnp.float32), jnp.zeros((B, H), jnp.float32))
    _, hs = jax.lax.scan(step, init, x)
    return hs


def bilstm_crf_forward_ref(sentences, params, *, hidden_dim, num_layers, labelset_size):
    T, B = sentences.shape
    x = params["embedding"][sentences]
    for layer in range(num_layers):
        p = params["lstm"][layer]
        h_fwd = lstm_direction_ref(x, p["w_ih"], p["w_hh"], p["b_ih"], p["b_hh"])
        h_bwd = lstm_direction_ref(
            x[::-1], p["w_ih_r"], p["w_hh_r"], p["b_ih_r"], p["b_hh_r"])[::-1]
        x = jnp.concatenate([h_fwd, h_bwd], axis=-1)
    lstm_out = x.reshape(T * B, hidden_dim)
    crf = lstm_out @ params["h2t_w"].T + params["h2t_b"]
    return crf.reshape(T, B, labelset_size, labelset_size)


# ----------------------------------------------------------------------------
# Deterministic parameter construction (PyTorch layout)
# ----------------------------------------------------------------------------
def make_params(key, *, vocab_size, embedding_dim, hidden_dim, num_layers, labelset_size):
    H_half = hidden_dim // 2
    keys = jax.random.split(key, 3 + num_layers)
    params = {}
    params["embedding"] = 0.1 * jax.random.normal(
        keys[0], (vocab_size, embedding_dim), jnp.float32)

    lstm_params = []
    for layer in range(num_layers):
        in_dim = embedding_dim if layer == 0 else hidden_dim
        lk = jax.random.split(keys[1 + layer], 8)
        scale = 0.2
        lp = {
            "w_ih": scale * jax.random.normal(lk[0], (4 * H_half, in_dim), jnp.float32),
            "w_hh": scale * jax.random.normal(lk[1], (4 * H_half, H_half), jnp.float32),
            "b_ih": scale * jax.random.normal(lk[2], (4 * H_half,), jnp.float32),
            "b_hh": scale * jax.random.normal(lk[3], (4 * H_half,), jnp.float32),
            "w_ih_r": scale * jax.random.normal(lk[4], (4 * H_half, in_dim), jnp.float32),
            "w_hh_r": scale * jax.random.normal(lk[5], (4 * H_half, H_half), jnp.float32),
            "b_ih_r": scale * jax.random.normal(lk[6], (4 * H_half,), jnp.float32),
            "b_hh_r": scale * jax.random.normal(lk[7], (4 * H_half,), jnp.float32),
        }
        lstm_params.append(lp)
    params["lstm"] = lstm_params

    params["h2t_w"] = 0.1 * jax.random.normal(
        keys[-2], (labelset_size * labelset_size, hidden_dim), jnp.float32)
    params["h2t_b"] = 0.1 * jax.random.normal(
        keys[-1], (labelset_size * labelset_size,), jnp.float32)
    return params


# ----------------------------------------------------------------------------
if __name__ == "__main__":
    # Small, forward-consistent shapes.
    T, B = 8, 2                  # [length, batch_size]
    vocab_size = 50
    embedding_dim = 32
    hidden_dim = 32              # per-direction hidden = 16
    num_layers = 2
    labelset_size = 6            # includes START and PAD labels

    key = jax.random.PRNGKey(0)
    pkey, skey = jax.random.split(key)
    params = make_params(
        pkey, vocab_size=vocab_size, embedding_dim=embedding_dim,
        hidden_dim=hidden_dim, num_layers=num_layers, labelset_size=labelset_size)
    prep = prepare_pallas_params(
        params, embedding_dim=embedding_dim, hidden_dim=hidden_dim,
        num_layers=num_layers, labelset_size=labelset_size)

    sentences = jax.random.randint(skey, (T, B), 0, vocab_size, dtype=jnp.int32)

    crf_scores = bilstm_crf_forward(
        sentences, prep,
        hidden_dim=hidden_dim, num_layers=num_layers, labelset_size=labelset_size)
    crf_scores = jax.block_until_ready(crf_scores)

    ref = bilstm_crf_forward_ref(
        sentences, params,
        hidden_dim=hidden_dim, num_layers=num_layers, labelset_size=labelset_size)
    ref = jax.block_until_ready(ref)

    assert crf_scores.shape == (T, B, labelset_size, labelset_size)
    np.testing.assert_allclose(np.asarray(crf_scores), np.asarray(ref),
                               rtol=1e-3, atol=1e-3)
    print("KERNEL_OK")
</pallas_src>

<mosaic_0001>
module attributes {stable_mosaic.version = 11 : i64} {
  func.func @input_proj_kernel(%arg0: i32, %arg1: memref<1x16x32xf32, #tpu.memory_space<vmem>>, %arg2: memref<1x32x128xf32, #tpu.memory_space<vmem>>, %arg3: memref<1x128xf32, #tpu.memory_space<vmem>>, %arg4: memref<2x16x64xf32, #tpu.memory_space<vmem>>) attributes {dimension_semantics = [#tpu.dimension_semantics<arbitrary>], iteration_bounds = array<i64: 1>, scalar_prefetch = 0 : i64, scratch_operands = 0 : i64, tpu.core_type = #tpu.core_type<tc>, window_params = [{pipeline_mode = #tpu.pipeline_mode<synchronous>, transform_indices = @transform_0, window_bounds = array<i64: 1, 16, 32>}, {pipeline_mode = #tpu.pipeline_mode<synchronous>, transform_indices = @transform_1, window_bounds = array<i64: 1, 32, 128>}, {pipeline_mode = #tpu.pipeline_mode<synchronous>, transform_indices = @transform_2, window_bounds = array<i64: 1, 128>}, {pipeline_mode = #tpu.pipeline_mode<synchronous>, transform_indices = @transform_3, window_bounds = array<i64: 2, 16, 64>}]} {
    %c0 = arith.constant 0 : index
    %c0_0 = arith.constant 0 : index
    %c0_1 = arith.constant 0 : index
    %0 = vector.load %arg1[%c0, %c0_0, %c0_1] : memref<1x16x32xf32, #tpu.memory_space<vmem>>, vector<1x16x32xf32>
    %1 = vector.shape_cast %0 : vector<1x16x32xf32> to vector<16x32xf32>
    %c0_2 = arith.constant 0 : index
    %c0_3 = arith.constant 0 : index
    %c0_4 = arith.constant 0 : index
    %2 = vector.load %arg2[%c0_2, %c0_3, %c0_4] : memref<1x32x128xf32, #tpu.memory_space<vmem>>, vector<1x32x128xf32>
    %3 = vector.shape_cast %2 : vector<1x32x128xf32> to vector<32x128xf32>
    %cst = arith.constant dense<0.000000e+00> : vector<16x128xf32>
    %4 = tpu.matmul %1, %3, %cst {dimension_numbers = #tpu.dot_dimension_numbers<[1], [0], [0], [1], [0, 0, 1, 1], [], []>} : vector<16x32xf32>, vector<32x128xf32>, vector<16x128xf32> -> vector<16x128xf32>
    %5 = vector.extract_strided_slice %4 {offsets = [0, 0], sizes = [16, 64], strides = [1, 1]} : vector<16x128xf32> to vector<16x64xf32>
    %c0_5 = arith.constant 0 : index
    %c0_6 = arith.constant 0 : index
    %6 = vector.load %arg3[%c0_5, %c0_6] : memref<1x128xf32, #tpu.memory_space<vmem>>, vector<1x64xf32>
    %7 = vector.broadcast %6 : vector<1x64xf32> to vector<16x64xf32>
    %8 = arith.addf %5, %7 : vector<16x64xf32>
    %c0_7 = arith.constant 0 : index
    %c0_8 = arith.constant 0 : index
    %c0_9 = arith.constant 0 : index
    %9 = vector.load %arg4[%c0_7, %c0_8, %c0_9] : memref<2x16x64xf32, #tpu.memory_space<vmem>>, vector<1x16x64xf32>
    %10 = vector.shape_cast %9 : vector<1x16x64xf32> to vector<16x64xf32>
    %11 = vector.shape_cast %8 : vector<16x64xf32> to vector<1x16x64xf32>
    tpu.vector_store %arg4[%c0_7, %c0_8, %c0_9], %11 {strides = array<i32>} : memref<2x16x64xf32, #tpu.memory_space<vmem>>, vector<1x16x64xf32>,
    %12 = vector.extract_strided_slice %4 {offsets = [0, 64], sizes = [16, 64], strides = [1, 1]} : vector<16x128xf32> to vector<16x64xf32>
    %c0_10 = arith.constant 0 : index
    %c64 = arith.constant 64 : index
    %13 = vector.load %arg3[%c0_10, %c64] : memref<1x128xf32, #tpu.memory_space<vmem>>, vector<1x64xf32>
    %14 = vector.broadcast %13 : vector<1x64xf32> to vector<16x64xf32>
    %15 = arith.addf %12, %14 : vector<16x64xf32>
    %c1 = arith.constant 1 : index
    %c0_11 = arith.constant 0 : index
    %c0_12 = arith.constant 0 : index
    %16 = vector.load %arg4[%c1, %c0_11, %c0_12] : memref<2x16x64xf32, #tpu.memory_space<vmem>>, vector<1x16x64xf32>
    %17 = vector.shape_cast %16 : vector<1x16x64xf32> to vector<16x64xf32>
    %18 = vector.shape_cast %15 : vector<16x64xf32> to vector<1x16x64xf32>
    tpu.vector_store %arg4[%c1, %c0_11, %c0_12], %18 {strides = array<i32>} : memref<2x16x64xf32, #tpu.memory_space<vmem>>, vector<1x16x64xf32>,
    return
  }
  func.func @transform_0(%arg0: i32) -> (i32, i32, i32) {
    %c0_i32 = arith.constant 0 : i32
    %c0_i32_0 = arith.constant 0 : i32
    %c0_i32_1 = arith.constant 0 : i32
    %c0_i32_2 = arith.constant 0 : i32
    return %c0_i32, %c0_i32_0, %c0_i32_1 : i32, i32, i32
  }
  func.func @transform_1(%arg0: i32) -> (i32, i32, i32) {
    %c0_i32 = arith.constant 0 : i32
    %c0_i32_0 = arith.constant 0 : i32
    %c0_i32_1 = arith.constant 0 : i32
    %c0_i32_2 = arith.constant 0 : i32
    return %c0_i32, %c0_i32_0, %c0_i32_1 : i32, i32, i32
  }
  func.func @transform_2(%arg0: i32) -> (i32, i32) {
    %c0_i32 = arith.constant 0 : i32
    %c0_i32_0 = arith.constant 0 : i32
    %c0_i32_1 = arith.constant 0 : i32
    return %c0_i32, %c0_i32_0 : i32, i32
  }
  func.func @transform_3(%arg0: i32) -> (i32, i32, i32) {
    %c0_i32 = arith.constant 0 : i32
    %c0_i32_0 = arith.constant 0 : i32
    %c0_i32_1 = arith.constant 0 : i32
    %c0_i32_2 = arith.constant 0 : i32
    return %c0_i32, %c0_i32_0, %c0_i32_1 : i32, i32, i32
  }
}

</mosaic_0001>

<llo_original>
// kernel: tpu_custom_call.1
$region0: #{tpu_custom_call.1}
  #allocation0 [shape = 'u32[]', space=smem, size = 0x4, offset = 0x4, fixed_abs, tag = 'smem constant byte address 0x4 - core index']
  #allocation1 [shape = 'u32[144,128]{1,0:T(1,128)}', space=vmem, size = 0x12000, scoped, tag = 'internal scratch']
  %s0 = inlined_call_operand.hbm [shape: f32[1,16,32], index: 0, kind: input, shape index: {}]
  %s1 = inlined_call_operand.hbm [shape: f32[1,32,128], index: 1, kind: input, shape index: {}]
  %s2 = inlined_call_operand.vmem [shape: f32[1,128], index: 2, kind: input, shape index: {}]
  %s3 = inlined_call_operand.hbm [shape: f32[2,16,64], index: 3, kind: output, shape index: {}]
  %s4 = sld [smem:[#allocation0]]
  $region30: #{tpu_custom_call.1} parent=0
    _
  %s6 = ssub.s32 1, %s4
  %s7 = scalar_select 0, %s6, %s4
  $region1: #{tpu_custom_call.1} parent=0
    #allocation2 [shape = 'u8[8192]{0}', space=vmem, size = 0x2000, scoped, tag = 'input window, operand 0, single buffered']
    #allocation3 [shape = 's32[1]{0}', space=sflag, size = 0x4, scoped, tag = 'scoped memory for tpu_custom_call.1']
    #allocation4 [shape = 's32[1]{0}', space=sflag, size = 0x4, scoped, tag = 'scoped memory for tpu_custom_call.1']
    #allocation5 [shape = 'u8[16384]{0}', space=vmem, size = 0x4000, scoped, tag = 'input window, operand 1, single buffered']
    #allocation6 [shape = 's32[1]{0}', space=sflag, size = 0x4, scoped, tag = 'scoped memory for tpu_custom_call.1']
    #allocation7 [shape = 'u8[16384]{0}', space=vmem, size = 0x4000, scoped, tag = 'output window, operand 0, single buffered']
    %8 = vsyncpa [#allocation3], 0
    %9 = vsyncpa [#allocation6], 0
    %10 = vsyncpa [#allocation4], 0
    // Predicated region
    $region2: #{tpu_custom_call.1} parent=1 // pred_check
      _
    $region3: #{tpu_custom_call.1} parent=1 // pred_check_branch
      %12 = sbr.rel (0) target = $region5
    $region4: #{tpu_custom_call.1} parent=1 // pred_region
      %s14 = ssub.s32 256, 256
      %15 = vsyncadd [#allocation3], %s14
      %s16 = sshll.u32 [#allocation2], 4
      %s17 = int_to_ptr.vmem [resolvable:$true] %s16
      %22 = dma.hbm_to_vmem [thread:$0]  %s0, 256, %s17, [#allocation3], 128, 128, 8
    $region5: #{tpu_custom_call.1} parent=1 // pred_fallthru
      _
    // Predicated region
    $region6: #{tpu_custom_call.1} parent=1 // pred_check
      _
    $region7: #{tpu_custom_call.1} parent=1 // pred_check_branch
      %24 = sbr.rel (0) target = $region9
    $region8: #{tpu_custom_call.1} parent=1 // pred_region
      %s26 = ssub.s32 512, 512
      %27 = vsyncadd [#allocation6], %s26
      %s28 = sshll.u32 [#allocation5], 4
      %s29 = int_to_ptr.vmem [resolvable:$true] %s28
      %34 = dma.hbm_to_vmem [thread:$0]  %s1, 512, %s29, [#allocation6], 128, 128, 8
    $region9: #{tpu_custom_call.1} parent=1 // pred_fallthru
      _
    // Predicated region
    $region10: #{tpu_custom_call.1} parent=1 // pred_check
      _
    $region11: #{tpu_custom_call.1} parent=1 // pred_check_branch
      %36 = sbr.rel (0) target = $region13
    $region12: #{tpu_custom_call.1} parent=1 // pred_region
      _
    $region13: #{tpu_custom_call.1} parent=1 // pred_fallthru
      _
    // Predicated region
    $region14: #{tpu_custom_call.1} parent=1 // pred_check
      _
    $region15: #{tpu_custom_call.1} parent=1 // pred_check_branch
      %38 = sbr.rel (0) target = $region17
    $region16: #{tpu_custom_call.1} parent=1 // pred_region
      %39 = dma.done [#allocation3], 256
    $region17: #{tpu_custom_call.1} parent=1 // pred_fallthru
      _
    // Predicated region
    $region18: #{tpu_custom_call.1} parent=1 // pred_check
      _
    $region19: #{tpu_custom_call.1} parent=1 // pred_check_branch
      %41 = sbr.rel (0) target = $region21
    $region20: #{tpu_custom_call.1} parent=1 // pred_region
      %42 = dma.done [#allocation6], 512
    $region21: #{tpu_custom_call.1} parent=1 // pred_fallthru
      _
    %v43 = vld [vmem:[#allocation2] sm:$0xff]
    %v44 = vld [vmem:[#allocation2 + $0x8] sm:$0xff]
    %v45 = vld [vmem:[#allocation5] sm:$0xff]
    %v46 = vld [vmem:[#allocation5 + $0x8] sm:$0xff]
    %v47 = vld [vmem:[#allocation5 + $0x10] sm:$0xff]
    %v48 = vld [vmem:[#allocation5 + $0x18] sm:$0xff]
    %vm49 = vcmask 261120
    %v51 = vsel %vm49, %v43, 0
    %v54 = vsel %vm49, %v44, 0
    %56 = vmatprep.subr.mxu0 0.0
    %57 = vmatpush1.msra.mxu0 %v45
    %58 = vmatprep.subr.mxu0 0.0
    %59 = vmatpush1.msra.mxu0 %v46
    %60 = vmatprep.subr.mxu0 0.0
    %61 = vmatpush1.msra.mxu0 %v47
    %62 = vmatprep.subr.mxu0 0.0
    %63 = vmatpush1.msra.mxu0 %v48
    %64 = vmatprep.subr.mxu0 0.0
    %65 = vmatpush1.msra.mxu0 0.0
    %66 = vmatprep.subr.mxu0 0.0
    %67 = vmatpush1.msra.mxu0 0.0
    %68 = vmatprep.subr.mxu0 0.0
    %69 = vmatpush1.msra.mxu0 0.0
    %70 = vmatprep.subr.mxu0 0.0
    %71 = vmatpush1.msra.mxu0 0.0
    %72 = vmatprep.subr.mxu0 0.0
    %73 = vmatpush1.msra.mxu0 0.0
    %74 = vmatprep.subr.mxu0 0.0
    %75 = vmatpush1.msra.mxu0 0.0
    %76 = vmatprep.subr.mxu0 0.0
    %77 = vmatpush1.msra.mxu0 0.0
    %78 = vmatprep.subr.mxu0 0.0
    %79 = vmatpush1.msra.mxu0 0.0
    %80 = vmatprep.subr.mxu0 0.0
    %81 = vmatpush1.msra.mxu0 0.0
    %82 = vmatprep.subr.mxu0 0.0
    %83 = vmatpush1.msra.mxu0 0.0
    %84 = vmatprep.subr.mxu0 0.0
    %85 = vmatpush1.msra.mxu0 0.0
    %86 = vmatprep.subr.mxu0 0.0
    %87 = vmatpush1.msra.mxu0 0.0
    %88 = vmatprep.subr.mxu0 0.0
    %89 = vmatpush1.msra.mxu0 0.0
    %90 = vmatprep.subr.mxu0 0.0
    %91 = vmatpush1.msra.mxu0 0.0
    %92 = vmatprep.subr.mxu0 0.0
    %93 = vmatpush1.msra.mxu0 0.0
    %94 = vmatprep.subr.mxu0 0.0
    %95 = vmatpush1.msra.mxu0 0.0
    %96 = vmatprep.subr.mxu0 0.0
    %97 = vmatpush1.msra.mxu0 0.0
    %98 = vmatprep.subr.mxu0 0.0
    %99 = vmatpush1.msra.mxu0 0.0
    %100 = vmatprep.subr.mxu0 0.0
    %101 = vmatpush1.msra.mxu0 0.0
    %102 = vmatprep.subr.mxu0 0.0
    %103 = vmatpush1.msra.mxu0 0.0
    %104 = vmatprep.subr.mxu0 0.0
    %105 = vmatpush1.msra.mxu0 0.0
    %106 = vmatprep.subr.mxu0 0.0
    %107 = vmatpush1.msra.mxu0 0.0
    %108 = vmatprep.subr.mxu0 0.0
    %109 = vmatpush1.msra.mxu0 0.0
    %110 = vmatprep.subr.mxu0 0.0
    %111 = vmatpush1.msra.mxu0 0.0
    %112 = vmatprep.subr.mxu0 0.0
    %113 = vmatpush1.msra.mxu0 0.0
    %114 = vmatprep.subr.mxu0 0.0
    %115 = vmatpush1.msra.mxu0 0.0
    %116 = vmatprep.subr.mxu0 0.0
    %117 = vmatpush1.msra.mxu0 0.0
    %118 = vmatprep.subr.mxu0 0.0
    %119 = vmatpush1.msra.mxu0 0.0
    %120 = vmatprep.mubr.f32.mxu0 0.0
    %121 = vmatmul.mubr.f32.gmra.mrb[0].mxu0 %v51
    %v122 = vpop.f32.mrb[0].mxu0
    %v123 = vadd.f32 0.0, %v122
    %v124 = vpop.f32.mrb[0].mxu0
    %125 = vmatprep.mubr.f32.mxu0 0.0
    %126 = vmatmul.mubr.f32.gmra.mrb[0].mxu0 %v54
    %v127 = vpop.f32.mrb[0].mxu0
    %v128 = vadd.f32 0.0, %v127
    %v129 = vpop.f32.mrb[0].mxu0
    %130 = vdwg.mxu0
    %v131 = vld [vmem:[%s2] sm:$0x1]
    %v133 = vlaneseq
    %v134 = vshrl.u32 %v133, 7
    %v135 = vsub.s32 0, %v134
    %v136 = vrot.slane %v131, %v135
    %v138 = vadd.f32 %v123, %v136
    %v139 = vadd.f32 %v128, %v136
    %vm140 = vcmask 523264
    %141 = vst.msk [vmem:[#allocation7] sm:$0xff] %vm140, %v138
    %142 = vst.msk [vmem:[#allocation7 + $0x8] sm:$0xff] %vm140, %v139
    %v143 = vld [vmem:[%s2] sm:$0x1]
    %v145 = vlaneseq
    %v146 = vshrl.u32 %v145, 7
    %v147 = vsub.s32 0, %v146
    %v148 = vrot.slane %v143, %v147
    %v150 = vadd.f32 %v123, %v148
    %v151 = vadd.f32 %v128, %v148
    %154 = vrot.lane.b32.xlu0 %v150, 64
    %v155 = vpop.permute.xlu0 %154
    %156 = vrot.lane.b32.xlu0 %v151, 64
    %v157 = vpop.permute.xlu0 %156
    %s160 = scalar_lea.vmem [#allocation7], 16
    %161 = vst.msk [vmem:[%s160] sm:$0xff] %vm140, %v155
    %162 = vst.msk [vmem:[%s160 + $0x8] sm:$0xff] %vm140, %v157
    // Predicated region
    $region22: #{tpu_custom_call.1} parent=1 // pred_check
      _
    $region23: #{tpu_custom_call.1} parent=1 // pred_check_branch
      %164 = sbr.rel (0) target = $region25
    $region24: #{tpu_custom_call.1} parent=1 // pred_region
      %s166 = ssub.s32 512, 512
      %167 = vsyncadd [#allocation4], %s166
      %s168 = sshll.u32 [#allocation7], 4
      %s169 = int_to_ptr.vmem [resolvable:$true] %s168
      %174 = dma.vmem_to_hbm [thread:$0]  %s169, 512, %s3, [#allocation4], 128, 128, 8
    $region25: #{tpu_custom_call.1} parent=1 // pred_fallthru
      _
    // Predicated region
    $region26: #{tpu_custom_call.1} parent=1 // pred_check
      _
    $region27: #{tpu_custom_call.1} parent=1 // pred_check_branch
      %176 = sbr.rel (0) target = $region29
    $region28: #{tpu_custom_call.1} parent=1 // pred_region
      %177 = dma.done [#allocation4], 512
    $region29: #{tpu_custom_call.1} parent=1 // pred_fallthru
      _
    %178 = vsyncpa [#allocation3], 1
    %179 = vsyncpa [#allocation6], 1
    %180 = vsyncpa [#allocation4], 1

</llo_original>
